<compile_context>
chip_gen: v6e
topology: v6e:2x2x1
jax: 0.10.0
libtpu: 0.0.40
codegen_flags: <defaults>
</compile_context>

<pallas_src>
import functools

import jax
import jax.numpy as jnp
from jax.experimental import pallas as pl
from jax.experimental.pallas import tpu as pltpu


# ---------------------------------------------------------------------------
# Kernels
# ---------------------------------------------------------------------------

def _ffn_resident_kernel(x_ref, w1_ref, b1_ref, w2_ref, b2_ref, o_ref):
    """Whole FFN for one token tile; W1/W2/b1/b2 resident in VMEM."""
    x = x_ref[...]                                       # (tile_m, n_emb), bf16
    h = jnp.dot(x, w1_ref[...], preferred_element_type=jnp.float32)
    h = jnp.maximum(h + b1_ref[...], 0.0)                # bias + ReLU in f32
    h = h.astype(w2_ref.dtype)                           # back to MXU dtype
    o = jnp.dot(h, w2_ref[...], preferred_element_type=jnp.float32) + b2_ref[...]
    o_ref[...] = o.astype(o_ref.dtype)


def _ffn_hidden_tiled_kernel(x_ref, w1_ref, b1_ref, w2_ref, b2_ref, o_ref,
                             acc_ref):
    """FFN with the 4*n_emb hidden dim tiled; 2nd matmul accumulated in f32."""
    k = pl.program_id(1)

    @pl.when(k == 0)
    def _():
        acc_ref[...] = jnp.zeros_like(acc_ref)

    h = jnp.dot(x_ref[...], w1_ref[...], preferred_element_type=jnp.float32)
    h = jnp.maximum(h + b1_ref[...], 0.0)
    h = h.astype(w2_ref.dtype)
    acc_ref[...] += jnp.dot(h, w2_ref[...], preferred_element_type=jnp.float32)

    @pl.when(k == pl.num_programs(1) - 1)
    def _():
        o_ref[...] = (acc_ref[...] + b2_ref[...]).astype(o_ref.dtype)


# ---------------------------------------------------------------------------
# Tiling helpers
# ---------------------------------------------------------------------------

def _round_up(v, m):
    return (v + m - 1) // m * m


def _pick_tile_m(m, tile_m_max):
    """Largest multiple of 16 <= tile_m_max dividing round_up(m, 16)."""
    m_pad = _round_up(m, 16)
    tile = 16
    for cand in range(16, min(tile_m_max, m_pad) + 1, 16):
        if m_pad % cand == 0:
            tile = cand
    return tile, m_pad


def _pick_tile_h(hidden, tile_h_max):
    """Largest multiple of 128 <= tile_h_max dividing hidden (else full)."""
    if hidden <= tile_h_max or hidden % 128 != 0:
        return hidden
    tile = 128
    for cand in range(128, tile_h_max + 1, 128):
        if hidden % cand == 0:
            tile = cand
    return tile


# Budget for keeping W1+W2 (single-buffered, compute dtype) resident in VMEM.
# Sized for v7x's 64 MiB physical VMEM with headroom for streamed x/out tiles
# and the f32 hidden intermediate; v5e/v6e (128 MiB) are looser.
_WEIGHT_RESIDENT_BUDGET = 36 * 1024 * 1024


# ---------------------------------------------------------------------------
# Wrapper
# ---------------------------------------------------------------------------

@functools.partial(
    jax.jit,
    static_argnames=("tile_m_max", "tile_h_max", "compute_dtype",
                     "force_hidden_tiling"))
def feedforward(x, w1, b1, w2, b2, *, tile_m_max=512, tile_h_max=512,
                compute_dtype=jnp.bfloat16, force_hidden_tiling=False):
    """Feedforward(x) = Dropout_eval(Linear2(ReLU(Linear1(x)))).

    x: (B, T, n_emb); w1: (n_emb, 4*n_emb); w2: (4*n_emb, n_emb).
    For best TPU performance n_emb should be a multiple of 128 (lane-dense
    loads/stores); other values are correct but use masked partial stores.
    """
    B, T, n_emb = x.shape
    hidden = w1.shape[1]
    out_dtype = x.dtype
    M = B * T

    tile_m, m_pad = _pick_tile_m(M, tile_m_max)

    # Flatten tokens; cast MXU operands to the compute dtype (bf16); biases
    # stay f32 so bias-add / ReLU run at accumulation precision.
    x2d = x.reshape(M, n_emb)
    if m_pad != M:
        x2d = jnp.pad(x2d, ((0, m_pad - M), (0, 0)))
    x2d = x2d.astype(compute_dtype)
    w1c = w1.astype(compute_dtype)
    w2c = w2.astype(compute_dtype)
    b1f = b1.reshape(1, hidden).astype(jnp.float32)
    b2f = b2.reshape(1, n_emb).astype(jnp.float32)

    cbytes = jnp.dtype(compute_dtype).itemsize
    obytes = jnp.dtype(out_dtype).itemsize
    flops = 4 * m_pad * n_emb * hidden                    # 2 matmuls, 2*M*K*N
    bytes_accessed = (m_pad * n_emb * (cbytes + obytes)   # x in, out
                      + 2 * n_emb * hidden * cbytes       # W1, W2
                      + (hidden + n_emb) * 4)             # biases
    cost = pl.CostEstimate(flops=int(flops), transcendentals=0,
                           bytes_accessed=int(bytes_accessed))

    resident_weight_bytes = 2 * n_emb * hidden * cbytes
    use_hidden_tiling = force_hidden_tiling or (
        resident_weight_bytes > _WEIGHT_RESIDENT_BUDGET)

    if not use_hidden_tiling:
        # Weight-resident path: grid only over token tiles.  Weights/biases are
        # grid-invariant (index map always (0, 0)) -> single-buffer them.
        vmem_est = (resident_weight_bytes
                    + 2 * (hidden + n_emb) * 4
                    + 3 * tile_m * n_emb * cbytes          # streamed x tiles
                    + 3 * tile_m * n_emb * obytes          # streamed out tiles
                    + tile_m * hidden * 4)                 # f32 hidden interm.
        grid_spec = pltpu.PrefetchScalarGridSpec(
            num_scalar_prefetch=0,
            grid=(m_pad // tile_m,),
            in_specs=[
                pl.BlockSpec((tile_m, n_emb), lambda i: (i, 0)),
                pl.BlockSpec((n_emb, hidden), lambda i: (0, 0),
                             pipeline_mode=pl.Buffered(1)),
                pl.BlockSpec((1, hidden), lambda i: (0, 0),
                             pipeline_mode=pl.Buffered(1)),
                pl.BlockSpec((hidden, n_emb), lambda i: (0, 0),
                             pipeline_mode=pl.Buffered(1)),
                pl.BlockSpec((1, n_emb), lambda i: (0, 0),
                             pipeline_mode=pl.Buffered(1)),
            ],
            out_specs=pl.BlockSpec((tile_m, n_emb), lambda i: (i, 0)),
        )
        kernel = _ffn_resident_kernel
        dim_sem = ("parallel",)
    else:
        # Hidden-tiled path: weights streamed per hidden tile, second matmul
        # accumulated in an f32 VMEM scratch (reduction axis last, arbitrary).
        tile_h = _pick_tile_h(hidden, tile_h_max)
        vmem_est = (4 * n_emb * tile_h * cbytes            # W1/W2 tiles (2x buf)
                    + 2 * (tile_h + n_emb) * 4
                    + 3 * tile_m * n_emb * cbytes
                    + 3 * tile_m * n_emb * obytes
                    + tile_m * n_emb * 4                   # accumulator
                    + tile_m * tile_h * 4)                 # f32 hidden interm.
        grid_spec = pltpu.PrefetchScalarGridSpec(
            num_scalar_prefetch=0,
            grid=(m_pad // tile_m, hidden // tile_h),
            in_specs=[
                pl.BlockSpec((tile_m, n_emb), lambda i, k: (i, 0)),
                pl.BlockSpec((n_emb, tile_h), lambda i, k: (0, k)),
                pl.BlockSpec((1, tile_h), lambda i, k: (0, k)),
                pl.BlockSpec((tile_h, n_emb), lambda i, k: (k, 0)),
                pl.BlockSpec((1, n_emb), lambda i, k: (0, 0)),
            ],
            out_specs=pl.BlockSpec((tile_m, n_emb), lambda i, k: (i, 0)),
            scratch_shapes=[pltpu.VMEM((tile_m, n_emb), jnp.float32)],
        )
        kernel = _ffn_hidden_tiled_kernel
        dim_sem = ("parallel", "arbitrary")

    # Raise the scoped-VMEM limit above the default, but keep it within the
    # smallest physical VMEM we target (64 MiB on v7x) with some headroom.
    vmem_limit = int(min(max(2 * vmem_est, 32 * 1024 * 1024),
                         60 * 1024 * 1024))

    out2d = pl.pallas_call(
        kernel,
        out_shape=jax.ShapeDtypeStruct((m_pad, n_emb), out_dtype),
        grid_spec=grid_spec,
        compiler_params=pltpu.CompilerParams(
            dimension_semantics=dim_sem,
            vmem_limit_bytes=vmem_limit),
        cost_estimate=cost,
    )(x2d, w1c, b1f, w2c, b2f)

    if m_pad != M:
        out2d = out2d[:M]
    return out2d.reshape(B, T, n_emb)


# ---------------------------------------------------------------------------
# Parameter init (nn.Linear-equivalent shapes; stored (in, out) so kernel does
# x @ W directly, equivalent to x @ W_pt.T)
# ---------------------------------------------------------------------------

def init_params(key, n_emb):
    hidden = 4 * n_emb
    k1, k2, k3, k4 = jax.random.split(key, 4)
    lim1 = 1.0 / jnp.sqrt(n_emb)
    lim2 = 1.0 / jnp.sqrt(hidden)
    w1 = jax.random.uniform(k1, (n_emb, hidden), jnp.float32, -lim1, lim1)
    b1 = jax.random.uniform(k2, (hidden,), jnp.float32, -lim1, lim1)
    w2 = jax.random.uniform(k3, (hidden, n_emb), jnp.float32, -lim2, lim2)
    b2 = jax.random.uniform(k4, (n_emb,), jnp.float32, -lim2, lim2)
    return w1, b1, w2, b2


if __name__ == "__main__":
    key = jax.random.PRNGKey(0)

    # Small demo shapes consistent with the module: batch=2, seq=8, n_emb=32.
    B, T, n_emb = 2, 8, 32
    kx, kp = jax.random.split(key)
    x = jax.random.normal(kx, (B, T, n_emb), jnp.float32)
    w1, b1, w2, b2 = init_params(kp, n_emb)

    out = jax.block_until_ready(feedforward(x, w1, b1, w2, b2))
    ref = jnp.maximum(x @ w1 + b1, 0.0) @ w2 + b2
    assert out.shape == (B, T, n_emb)
    # bf16 MXU inputs with f32 accumulation -> tolerance loosened vs f32 ref.
    assert jnp.allclose(out, ref, atol=3e-2, rtol=3e-2), \
        float(jnp.max(jnp.abs(out - ref)))

    # Also exercise the hidden-tiled (VMEM-bounded) path with 2 accumulation
    # steps (n_emb=64 -> hidden=256, tile_h=128).
    B2, T2, n_emb2 = 2, 8, 64
    kx2, kp2 = jax.random.split(jax.random.PRNGKey(1))
    x2 = jax.random.normal(kx2, (B2, T2, n_emb2), jnp.float32)
    p2 = init_params(kp2, n_emb2)
    out2 = jax.block_until_ready(
        feedforward(x2, *p2, tile_h_max=128, force_hidden_tiling=True))
    ref2 = jnp.maximum(x2 @ p2[0] + p2[1], 0.0) @ p2[2] + p2[3]
    assert out2.shape == (B2, T2, n_emb2)
    assert jnp.allclose(out2, ref2, atol=3e-2, rtol=3e-2), \
        float(jnp.max(jnp.abs(out2 - ref2)))

    print("KERNEL_OK")
</pallas_src>

<mosaic_0001>
module attributes {stable_mosaic.version = 11 : i64} {
  func.func @_ffn_resident_kernel(%arg0: i32, %arg1: memref<16x32xbf16, #tpu.memory_space<vmem>>, %arg2: memref<32x128xbf16, #tpu.memory_space<vmem>>, %arg3: memref<1x128xf32, #tpu.memory_space<vmem>>, %arg4: memref<128x32xbf16, #tpu.memory_space<vmem>>, %arg5: memref<1x32xf32, #tpu.memory_space<vmem>>, %arg6: memref<16x32xf32, #tpu.memory_space<vmem>>) attributes {dimension_semantics = [#tpu.dimension_semantics<parallel>], iteration_bounds = array<i64: 1>, scalar_prefetch = 0 : i64, scratch_operands = 0 : i64, tpu.core_type = #tpu.core_type<tc>, window_params = [{transform_indices = @transform_0, window_bounds = array<i64: 16, 32>}, {pipeline_mode = #tpu.pipeline_mode<synchronous>, transform_indices = @transform_1, window_bounds = array<i64: 32, 128>}, {pipeline_mode = #tpu.pipeline_mode<synchronous>, transform_indices = @transform_2, window_bounds = array<i64: 1, 128>}, {pipeline_mode = #tpu.pipeline_mode<synchronous>, transform_indices = @transform_3, window_bounds = array<i64: 128, 32>}, {pipeline_mode = #tpu.pipeline_mode<synchronous>, transform_indices = @transform_4, window_bounds = array<i64: 1, 32>}, {transform_indices = @transform_5, window_bounds = array<i64: 16, 32>}]} {
    %c0 = arith.constant 0 : index
    %c0_0 = arith.constant 0 : index
    %0 = vector.load %arg1[%c0, %c0_0] : memref<16x32xbf16, #tpu.memory_space<vmem>>, vector<16x32xbf16>
    %c0_1 = arith.constant 0 : index
    %c0_2 = arith.constant 0 : index
    %1 = vector.load %arg2[%c0_1, %c0_2] : memref<32x128xbf16, #tpu.memory_space<vmem>>, vector<32x128xbf16>
    %cst = arith.constant dense<0.000000e+00> : vector<16x128xf32>
    %2 = tpu.matmul %0, %1, %cst {dimension_numbers = #tpu.dot_dimension_numbers<[1], [0], [0], [1], [0, 0, 1, 1], [], []>} : vector<16x32xbf16>, vector<32x128xbf16>, vector<16x128xf32> -> vector<16x128xf32>
    %c0_3 = arith.constant 0 : index
    %c0_4 = arith.constant 0 : index
    %3 = vector.load %arg3[%c0_3, %c0_4] : memref<1x128xf32, #tpu.memory_space<vmem>>, vector<1x128xf32>
    %4 = vector.broadcast %3 : vector<1x128xf32> to vector<16x128xf32>
    %5 = arith.addf %2, %4 : vector<16x128xf32>
    %cst_5 = arith.constant 0.000000e+00 : f32
    %6 = vector.broadcast %cst_5 : f32 to vector<16x128xf32>
    %7 = arith.maximumf %5, %6 : vector<16x128xf32>
    %8 = arith.truncf %7 : vector<16x128xf32> to vector<16x128xbf16>
    %c0_6 = arith.constant 0 : index
    %c0_7 = arith.constant 0 : index
    %9 = vector.load %arg4[%c0_6, %c0_7] : memref<128x32xbf16, #tpu.memory_space<vmem>>, vector<128x32xbf16>
    %cst_8 = arith.constant dense<0.000000e+00> : vector<16x32xf32>
    %10 = tpu.matmul %8, %9, %cst_8 {dimension_numbers = #tpu.dot_dimension_numbers<[1], [0], [0], [1], [0, 0, 1, 1], [], []>} : vector<16x128xbf16>, vector<128x32xbf16>, vector<16x32xf32> -> vector<16x32xf32>
    %c0_9 = arith.constant 0 : index
    %c0_10 = arith.constant 0 : index
    %11 = vector.load %arg5[%c0_9, %c0_10] : memref<1x32xf32, #tpu.memory_space<vmem>>, vector<1x32xf32>
    %12 = vector.broadcast %11 : vector<1x32xf32> to vector<16x32xf32>
    %13 = arith.addf %10, %12 : vector<16x32xf32>
    %c0_11 = arith.constant 0 : index
    %c0_12 = arith.constant 0 : index
    %14 = vector.load %arg6[%c0_11, %c0_12] : memref<16x32xf32, #tpu.memory_space<vmem>>, vector<16x32xf32>
    tpu.vector_store %arg6[%c0_11, %c0_12], %13 {strides = array<i32>} : memref<16x32xf32, #tpu.memory_space<vmem>>, vector<16x32xf32>,
    return
  }
  func.func @transform_0(%arg0: i32) -> (i32, i32) {
    %c0_i32 = arith.constant 0 : i32
    %c0_i32_0 = arith.constant 0 : i32
    return %arg0, %c0_i32 : i32, i32
  }
  func.func @transform_1(%arg0: i32) -> (i32, i32) {
    %c0_i32 = arith.constant 0 : i32
    %c0_i32_0 = arith.constant 0 : i32
    %c0_i32_1 = arith.constant 0 : i32
    return %c0_i32, %c0_i32_0 : i32, i32
  }
  func.func @transform_2(%arg0: i32) -> (i32, i32) {
    %c0_i32 = arith.constant 0 : i32
    %c0_i32_0 = arith.constant 0 : i32
    %c0_i32_1 = arith.constant 0 : i32
    return %c0_i32, %c0_i32_0 : i32, i32
  }
  func.func @transform_3(%arg0: i32) -> (i32, i32) {
    %c0_i32 = arith.constant 0 : i32
    %c0_i32_0 = arith.constant 0 : i32
    %c0_i32_1 = arith.constant 0 : i32
    return %c0_i32, %c0_i32_0 : i32, i32
  }
  func.func @transform_4(%arg0: i32) -> (i32, i32) {
    %c0_i32 = arith.constant 0 : i32
    %c0_i32_0 = arith.constant 0 : i32
    %c0_i32_1 = arith.constant 0 : i32
    return %c0_i32, %c0_i32_0 : i32, i32
  }
  func.func @transform_5(%arg0: i32) -> (i32, i32) {
    %c0_i32 = arith.constant 0 : i32
    %c0_i32_0 = arith.constant 0 : i32
    return %arg0, %c0_i32 : i32, i32
  }
}

</mosaic_0001>

<llo_original>
// kernel: feedforward.1
$region0: #{feedforward.1}
  #allocation0 [shape = 'u32[]', space=smem, size = 0x4, offset = 0x4, fixed_abs, tag = 'smem constant byte address 0x4 - core index']
  #allocation1 [shape = 'u32[144,128]{1,0:T(1,128)}', space=vmem, size = 0x12000, scoped, tag = 'internal scratch']
  %s0 = inlined_call_operand.vmem [shape: bf16[16,32], index: 0, kind: input, shape index: {}]
  %s1 = inlined_call_operand.vmem [shape: bf16[32,128], index: 1, kind: input, shape index: {}]
  %s2 = inlined_call_operand.vmem [shape: f32[1,128], index: 2, kind: input, shape index: {}]
  %s3 = inlined_call_operand.vmem [shape: bf16[128,32], index: 3, kind: input, shape index: {}]
  %s4 = inlined_call_operand.vmem [shape: f32[1,32], index: 4, kind: input, shape index: {}]
  %s5 = inlined_call_operand.hbm [shape: f32[16,32], index: 5, kind: output, shape index: {}]
  %s6 = sld [smem:[#allocation0]]
  $region30: #{feedforward.1} parent=0
    _
  %s8 = ssub.s32 1, %s6
  %s9 = scalar_select 0, %s8, %s6
  $region1: #{feedforward.1} parent=0
    #allocation2 [shape = 'u8[8192]{0}', space=vmem, size = 0x2000, scoped, tag = 'output window, operand 0, single buffered']
    #allocation3 [shape = 's32[1]{0}', space=sflag, size = 0x4, scoped, tag = 'scoped memory for feedforward.1']
    %10 = vsyncpa [#allocation3], 0
    // Predicated region
    $region2: #{feedforward.1} parent=1 // pred_check
      _
    $region3: #{feedforward.1} parent=1 // pred_check_branch
      %12 = sbr.rel (0) target = $region5
    $region4: #{feedforward.1} parent=1 // pred_region
      _
    $region5: #{feedforward.1} parent=1 // pred_fallthru
      _
    // Predicated region
    $region6: #{feedforward.1} parent=1 // pred_check
      _
    $region7: #{feedforward.1} parent=1 // pred_check_branch
      %14 = sbr.rel (0) target = $region9
    $region8: #{feedforward.1} parent=1 // pred_region
      _
    $region9: #{feedforward.1} parent=1 // pred_fallthru
      _
    // Predicated region
    $region10: #{feedforward.1} parent=1 // pred_check
      _
    $region11: #{feedforward.1} parent=1 // pred_check_branch
      %16 = sbr.rel (0) target = $region13
    $region12: #{feedforward.1} parent=1 // pred_region
      _
    $region13: #{feedforward.1} parent=1 // pred_fallthru
      _
    // Predicated region
    $region14: #{feedforward.1} parent=1 // pred_check
      _
    $region15: #{feedforward.1} parent=1 // pred_check_branch
      %18 = sbr.rel (0) target = $region17
    $region16: #{feedforward.1} parent=1 // pred_region
      _
    $region17: #{feedforward.1} parent=1 // pred_fallthru
      _
    // Predicated region
    $region18: #{feedforward.1} parent=1 // pred_check
      _
    $region19: #{feedforward.1} parent=1 // pred_check_branch
      %20 = sbr.rel (0) target = $region21
    $region20: #{feedforward.1} parent=1 // pred_region
      _
    $region21: #{feedforward.1} parent=1 // pred_fallthru
      _
    %v22 = vld [vmem:[%s0] sm:$0xf]
    %v23 = vld [vmem:[%s0 + $0x4] sm:$0xf]
    %v24 = vld [vmem:[%s1] sm:$0xf]
    %v25 = vld [vmem:[%s1 + $0x4] sm:$0xf]
    %v26 = vld [vmem:[%s1 + $0x8] sm:$0xf]
    %v27 = vld [vmem:[%s1 + $0xc] sm:$0xf]
    %v28 = vld [vmem:[%s2] sm:$0x1]
    %v30 = vlaneseq
    %v31 = vshrl.u32 %v30, 7
    %v32 = vsub.s32 0, %v31
    %v33 = vrot.slane %v28, %v32
    %v37 = vunpack.c.l.b16 %v22
    %v38 = vunpack.c.l.b16 %v23
    %v39 = vpack.c.b16 %v38, %v37
    %v44 = vunpack.c.l.b16 %v24
    %v45 = vunpack.c.l.b16 %v25
    %v46 = vunpack.c.l.b16 %v26
    %v47 = vunpack.c.l.b16 %v27
    %v48 = vpack.c.b16 %v45, %v44
    %v49 = vpack.c.b16 %v47, %v46
    %vm52 = vcmask 261120
    %v54 = vsel %vm52, %v39, 0
    %56 = vmatprep.subr.bf16.mxu0 0
    %57 = vmatpush1.bf16.msra.mxu0 0
    %58 = vmatprep.subr.bf16.mxu0 0
    %59 = vmatpush1.bf16.msra.mxu0 0
    %60 = vmatprep.subr.bf16.mxu0 0
    %61 = vmatpush1.bf16.msra.mxu0 0
    %62 = vmatprep.subr.bf16.mxu0 0
    %63 = vmatpush1.bf16.msra.mxu0 0
    %64 = vmatprep.subr.bf16.mxu0 0
    %65 = vmatpush1.bf16.msra.mxu0 0
    %66 = vmatprep.subr.bf16.mxu0 0
    %67 = vmatpush1.bf16.msra.mxu0 0
    %68 = vmatprep.subr.bf16.mxu0 0
    %69 = vmatpush1.bf16.msra.mxu0 %v49
    %70 = vmatprep.subr.bf16.mxu0 0
    %71 = vmatpush1.bf16.msra.mxu0 %v48
    %72 = vmatprep.subr.bf16.mxu0 0
    %73 = vmatpush2.bf16.msra.mxu0 0
    %74 = vmatprep.subr.bf16.mxu0 0
    %75 = vmatpush2.bf16.msra.mxu0 0
    %76 = vmatprep.subr.bf16.mxu0 0
    %77 = vmatpush2.bf16.msra.mxu0 0
    %78 = vmatprep.subr.bf16.mxu0 0
    %79 = vmatpush2.bf16.msra.mxu0 0
    %80 = vmatprep.subr.bf16.mxu0 0
    %81 = vmatpush2.bf16.msra.mxu0 0
    %82 = vmatprep.subr.bf16.mxu0 0
    %83 = vmatpush2.bf16.msra.mxu0 0
    %84 = vmatprep.subr.bf16.mxu0 0
    %85 = vmatpush2.bf16.msra.mxu0 0
    %86 = vmatprep.subr.bf16.mxu0 0
    %87 = vmatpush2.bf16.msra.mxu0 0
    %88 = vmatprep.mubr.bf16.mxu0 0
    %89 = vmatmul.mubr.bf16.gmra.mxu0 %v54
    %v90 = vpop.f32.mrf.mxu0
    %v91 = vadd.f32 %v33, %v90
    %v92 = vpop.f32.mrf.mxu0
    %v93 = vpop.f32.mrf.mxu0
    %v94 = vadd.f32 %v33, %v93
    %v95 = vpop.f32.mrf.mxu0
    %96 = vdwg.mxu0
    %v97 = vmax.f32 %v91, 0.0
    %v98 = vmax.f32 %v94, 0.0
    %v99 = vpack.c.bf16 %v98, %v97
    %v100 = vld [vmem:[%s3] sm:$0xf]
    %v101 = vld [vmem:[%s3 + $0x4] sm:$0xf]
    %v102 = vld [vmem:[%s3 + $0x8] sm:$0xf]
    %v103 = vld [vmem:[%s3 + $0xc] sm:$0xf]
    %v104 = vld [vmem:[%s3 + $0x10] sm:$0xf]
    %v105 = vld [vmem:[%s3 + $0x14] sm:$0xf]
    %v106 = vld [vmem:[%s3 + $0x18] sm:$0xf]
    %v107 = vld [vmem:[%s3 + $0x1c] sm:$0xf]
    %v108 = vld [vmem:[%s3 + $0x20] sm:$0xf]
    %v109 = vld [vmem:[%s3 + $0x24] sm:$0xf]
    %v110 = vld [vmem:[%s3 + $0x28] sm:$0xf]
    %v111 = vld [vmem:[%s3 + $0x2c] sm:$0xf]
    %v112 = vld [vmem:[%s3 + $0x30] sm:$0xf]
    %v113 = vld [vmem:[%s3 + $0x34] sm:$0xf]
    %v114 = vld [vmem:[%s3 + $0x38] sm:$0xf]
    %v115 = vld [vmem:[%s3 + $0x3c] sm:$0xf]
    %v116 = vld [vmem:[%s4] sm:$0x1]
    %v118 = vlaneseq
    %v119 = vshrl.u32 %v118, 7
    %v120 = vsub.s32 0, %v119
    %v121 = vrot.slane %v116, %v120
    %v139 = vunpack.c.l.b16 %v100
    %v140 = vunpack.c.l.b16 %v101
    %v141 = vunpack.c.l.b16 %v102
    %v142 = vunpack.c.l.b16 %v103
    %v143 = vunpack.c.l.b16 %v104
    %v144 = vunpack.c.l.b16 %v105
    %v145 = vunpack.c.l.b16 %v106
    %v146 = vunpack.c.l.b16 %v107
    %v147 = vunpack.c.l.b16 %v108
    %v148 = vunpack.c.l.b16 %v109
    %v149 = vunpack.c.l.b16 %v110
    %v150 = vunpack.c.l.b16 %v111
    %v151 = vunpack.c.l.b16 %v112
    %v152 = vunpack.c.l.b16 %v113
    %v153 = vunpack.c.l.b16 %v114
    %v154 = vunpack.c.l.b16 %v115
    %v155 = vpack.c.b16 %v140, %v139
    %v156 = vpack.c.b16 %v142, %v141
    %v157 = vpack.c.b16 %v144, %v143
    %v158 = vpack.c.b16 %v146, %v145
    %v159 = vpack.c.b16 %v148, %v147
    %v160 = vpack.c.b16 %v150, %v149
    %v161 = vpack.c.b16 %v152, %v151
    %v162 = vpack.c.b16 %v154, %v153
    %171 = vmatprep.subr.bf16.mxu0 0
    %172 = vmatpush1.bf16.msra.mxu0 %v162
    %173 = vmatprep.subr.bf16.mxu0 0
    %174 = vmatpush1.bf16.msra.mxu0 %v161
    %175 = vmatprep.subr.bf16.mxu0 0
    %176 = vmatpush1.bf16.msra.mxu0 %v160
    %177 = vmatprep.subr.bf16.mxu0 0
    %178 = vmatpush1.bf16.msra.mxu0 %v159
    %179 = vmatprep.subr.bf16.mxu0 0
    %180 = vmatpush1.bf16.msra.mxu0 %v158
    %181 = vmatprep.subr.bf16.mxu0 0
    %182 = vmatpush1.bf16.msra.mxu0 %v157
    %183 = vmatprep.subr.bf16.mxu0 0
    %184 = vmatpush1.bf16.msra.mxu0 %v156
    %185 = vmatprep.subr.bf16.mxu0 0
    %186 = vmatpush1.bf16.msra.mxu0 %v155
    %187 = vmatprep.subr.bf16.mxu0 0
    %188 = vmatpush2.bf16.msra.mxu0 0
    %189 = vmatprep.subr.bf16.mxu0 0
    %190 = vmatpush2.bf16.msra.mxu0 0
    %191 = vmatprep.subr.bf16.mxu0 0
    %192 = vmatpush2.bf16.msra.mxu0 0
    %193 = vmatprep.subr.bf16.mxu0 0
    %194 = vmatpush2.bf16.msra.mxu0 0
    %195 = vmatprep.subr.bf16.mxu0 0
    %196 = vmatpush2.bf16.msra.mxu0 0
    %197 = vmatprep.subr.bf16.mxu0 0
    %198 = vmatpush2.bf16.msra.mxu0 0
    %199 = vmatprep.subr.bf16.mxu0 0
    %200 = vmatpush2.bf16.msra.mxu0 0
    %201 = vmatprep.subr.bf16.mxu0 0
    %202 = vmatpush2.bf16.msra.mxu0 0
    %203 = vmatprep.mubr.bf16.mxu0 0
    %204 = vmatmul.mubr.bf16.gmra.mxu0 %v99
    %v205 = vpop.f32.mrf.mxu0
    %v206 = vadd.f32 %v121, %v205
    %v207 = vpop.f32.mrf.mxu0
    %v208 = vpop.f32.mrf.mxu0
    %v209 = vadd.f32 %v121, %v208
    %v210 = vpop.f32.mrf.mxu0
    %211 = vdwg.mxu0
    %212 = vst.msk [vmem:[#allocation2] sm:$0xff] %vm52, %v206
    %213 = vst.msk [vmem:[#allocation2 + $0x8] sm:$0xff] %vm52, %v209
    // Predicated region
    $region22: #{feedforward.1} parent=1 // pred_check
      _
    $region23: #{feedforward.1} parent=1 // pred_check_branch
      %215 = sbr.rel (0) target = $region25
    $region24: #{feedforward.1} parent=1 // pred_region
      %s217 = ssub.s32 256, 256
      %218 = vsyncadd [#allocation3], %s217
      %s219 = sshll.u32 [#allocation2], 4
      %s220 = int_to_ptr.vmem [resolvable:$true] %s219
      %225 = dma.vmem_to_hbm [thread:$0]  %s220, 256, %s5, [#allocation3], 128, 128, 8
    $region25: #{feedforward.1} parent=1 // pred_fallthru
      _
    // Predicated region
    $region26: #{feedforward.1} parent=1 // pred_check
      _
    $region27: #{feedforward.1} parent=1 // pred_check_branch
      %227 = sbr.rel (0) target = $region29
    $region28: #{feedforward.1} parent=1 // pred_region
      %228 = dma.done [#allocation3], 256
    $region29: #{feedforward.1} parent=1 // pred_fallthru
      _
    %229 = vsyncpa [#allocation3], 1

</llo_original>
